<compile_context>
chip_gen: v6e
topology: v6e:2x2x1
jax: 0.10.0
libtpu: 0.0.40
codegen_flags: <defaults>
</compile_context>

<pallas_src>
import jax
import jax.numpy as jnp
from jax.experimental import pallas as pl
from jax.experimental.pallas import tpu as pltpu


DEG_DIM = 512                          # module forces degradation_dim = 512
NUM_FEAT = 64                          # default num_feat
HID = (DEG_DIM + NUM_FEAT * 2) // 2    # 320
OUT_DIM = NUM_FEAT * 2                 # 128
LANE = 128


# --------------------------------------------------------------------------
# MLP kernel: runs ONCE for the whole batch (single invocation, no grid).
# --------------------------------------------------------------------------
def _mlp_kernel(d_ref, w1_ref, b1_ref, w2_ref, b2_ref, w3_ref, b3_ref, mod_ref):
    h = jnp.dot(d_ref[...], w1_ref[...],
                preferred_element_type=jnp.float32) + b1_ref[...]
    h = jnp.maximum(h, 0.0)
    h = jnp.dot(h, w2_ref[...],
                preferred_element_type=jnp.float32) + b2_ref[...]
    h = jnp.maximum(h, 0.0)
    mod = jnp.dot(h, w3_ref[...],
                  preferred_element_type=jnp.float32) + b3_ref[...]
    mod_ref[...] = mod.astype(mod_ref.dtype)


def _run_mlp(d, w1, b1, w2, b2, w3, b3):
    B = d.shape[0]
    return pl.pallas_call(
        _mlp_kernel,
        out_shape=jax.ShapeDtypeStruct((B, OUT_DIM), jnp.float32),
        cost_estimate=pl.CostEstimate(
            flops=2 * B * (DEG_DIM * HID + HID * HID + HID * OUT_DIM),
            transcendentals=0,
            bytes_accessed=4 * (B * DEG_DIM + DEG_DIM * HID + HID * HID
                                + HID * OUT_DIM + 2 * HID + OUT_DIM
                                + B * OUT_DIM)),
    )(d, w1, b1, w2, b2, w3, b3)


# --------------------------------------------------------------------------
# Modulate kernel: pure HBM-bandwidth-bound streaming multiply-add.
#   g1/beta blocks are (rows, 128) replicated-lane tiles (unmasked loads);
#   column 0 is the per-row scalar, broadcast along HW inside the FMA.
# --------------------------------------------------------------------------
def _modulate_kernel(g1_ref, beta_ref, x_ref, o_ref):
    g1 = g1_ref[...][:, :1]      # (rows, 1)  per-row (1 + gamma)
    beta = beta_ref[...][:, :1]  # (rows, 1)  per-row beta
    o_ref[...] = (g1 * x_ref[...] + beta).astype(o_ref.dtype)


# x in + out, double-buffered, must stay well inside every generation's scoped
# VMEM default (v5e 16 MiB, v6e/v7x 32 MiB): keep x blocks <= 2 MiB.
_MAX_BLOCK_ELEMS = (8 * 1024 * 1024) // (4 * 4)   # 512K f32 elems per x block


def _pick_tiles(bc, hw):
    """Pick (row_tile, hw_tile) for the (B*C, HW) modulate pass."""
    if hw <= 8192:
        hw_tile = hw          # full lane extent is always legal
    else:
        hw_tile = 8192        # lane-dense multiple of 128, unmasked stores
        # TODO(synk): pad HW to a multiple of hw_tile if a ragged (masked)
        # last tile ever shows up as a hot spot in profiles.
    max_rows = max(8, min(1024, _MAX_BLOCK_ELEMS // hw_tile))
    if bc <= max_rows:
        return bc, hw_tile
    row_tile = NUM_FEAT       # 64 always divides bc (= B * 64)
    while row_tile * 2 <= max_rows and bc % (row_tile * 2) == 0:
        row_tile *= 2
    return row_tile, hw_tile


def affine_modulate(x_nchw, d, params):
    """x_nchw: (B, C, H, W) float32; d: (B, 512) float32."""
    w1, b1, w2, b2, w3, b3 = params
    B, C, H, W = x_nchw.shape
    assert C == NUM_FEAT, "AffineModulate is built for num_feat=64"
    HW = H * W
    BC = B * C

    # Fold the '+1' on gamma into the last-layer bias: the MLP kernel then
    # emits [1+gamma | beta] directly.
    b3_adj = b3 + jnp.concatenate(
        [jnp.ones((1, C), b3.dtype), jnp.zeros((1, C), b3.dtype)], axis=1)

    # Degradation MLP once for the whole batch (one MXU pass).
    mod = _run_mlp(d, w1, b1, w2, b2, w3, b3_adj)          # (B, 2C)

    # Lane-dense per-row scalars: (B*C, 128), value replicated across lanes,
    # row order b*C + c matches the flattened x below.
    g1 = jnp.broadcast_to(mod[:, :C].reshape(BC, 1), (BC, LANE))
    beta = jnp.broadcast_to(mod[:, C:].reshape(BC, 1), (BC, LANE))

    # Free, contiguous reshape (no transpose): NCHW -> (B*C, HW).  Batch is
    # folded into the sublane axis so the grid has enough steps for megacore.
    x_flat = x_nchw.reshape(BC, HW)

    row_tile, hw_tile = _pick_tiles(BC, HW)
    grid = (pl.cdiv(BC, row_tile), pl.cdiv(HW, hw_tile))

    out_flat = pl.pallas_call(
        _modulate_kernel,
        out_shape=jax.ShapeDtypeStruct((BC, HW), x_nchw.dtype),
        grid=grid,
        in_specs=[
            pl.BlockSpec((row_tile, LANE), lambda r, t: (r, 0)),      # 1+gamma
            pl.BlockSpec((row_tile, LANE), lambda r, t: (r, 0)),      # beta
            pl.BlockSpec((row_tile, hw_tile), lambda r, t: (r, t)),   # x
        ],
        out_specs=pl.BlockSpec((row_tile, hw_tile), lambda r, t: (r, t)),
        compiler_params=pltpu.CompilerParams(
            dimension_semantics=("parallel", "parallel")),
        cost_estimate=pl.CostEstimate(
            flops=2 * BC * HW,
            transcendentals=0,
            bytes_accessed=4 * (2 * BC * HW + 2 * BC * LANE)),
    )(g1, beta, x_flat)

    # Free reshape back to NCHW.
    return out_flat.reshape(B, C, H, W)


# --------------------------------------------------------------------------
# Params + pure-JAX reference for correctness check.
# --------------------------------------------------------------------------
def init_params(key, scale=0.1):
    """Synthetic init mimicking default_init_weights (kaiming-ish * 0.1, zero bias)."""
    k1, k2, k3 = jax.random.split(key, 3)

    def lin(k, fan_in, fan_out):
        std = (2.0 / fan_in) ** 0.5
        w = jax.random.normal(k, (fan_in, fan_out), jnp.float32) * std * scale
        b = jnp.zeros((1, fan_out), jnp.float32)
        return w, b

    w1, b1 = lin(k1, DEG_DIM, HID)
    w2, b2 = lin(k2, HID, HID)
    w3, b3 = lin(k3, HID, OUT_DIM)
    return (w1, b1, w2, b2, w3, b3)


def affine_modulate_ref(x_nchw, d, params):
    w1, b1, w2, b2, w3, b3 = params
    h = jnp.maximum(d @ w1 + b1, 0.0)
    h = jnp.maximum(h @ w2 + b2, 0.0)
    mod = h @ w3 + b3                              # (B, 2C)
    gamma = mod[:, :NUM_FEAT][:, :, None, None]    # (B, C, 1, 1)
    beta = mod[:, NUM_FEAT:][:, :, None, None]
    return (1.0 + gamma) * x_nchw + beta


if __name__ == "__main__":
    key = jax.random.PRNGKey(0)
    kx, kd, kp = jax.random.split(key, 3)

    B, C, H, W = 2, NUM_FEAT, 16, 16
    x = jax.random.normal(kx, (B, C, H, W), jnp.float32)
    d = jax.random.normal(kd, (B, DEG_DIM), jnp.float32)
    params = init_params(kp)

    out = affine_modulate(x, d, params)
    out = jax.block_until_ready(out)

    ref = affine_modulate_ref(x, d, params)
    assert out.shape == (B, C, H, W)
    assert jnp.allclose(out, ref, atol=1e-4, rtol=1e-4)

    print("KERNEL_OK")
</pallas_src>

<mosaic_0001>
module attributes {stable_mosaic.version = 11 : i64} {
  func.func @_mlp_kernel(%arg0: memref<2x512xf32, #tpu.memory_space<vmem>>, %arg1: memref<512x320xf32, #tpu.memory_space<vmem>>, %arg2: memref<1x320xf32, #tpu.memory_space<vmem>>, %arg3: memref<320x320xf32, #tpu.memory_space<vmem>>, %arg4: memref<1x320xf32, #tpu.memory_space<vmem>>, %arg5: memref<320x128xf32, #tpu.memory_space<vmem>>, %arg6: memref<1x128xf32, #tpu.memory_space<vmem>>, %arg7: memref<2x128xf32, #tpu.memory_space<vmem>>) attributes {dimension_semantics = [], scalar_prefetch = 0 : i64, scratch_operands = 0 : i64, tpu.core_type = #tpu.core_type<tc>} {
    %c0 = arith.constant 0 : index
    %c0_0 = arith.constant 0 : index
    %0 = vector.load %arg0[%c0, %c0_0] : memref<2x512xf32, #tpu.memory_space<vmem>>, vector<2x512xf32>
    %c0_1 = arith.constant 0 : index
    %c0_2 = arith.constant 0 : index
    %1 = vector.load %arg1[%c0_1, %c0_2] : memref<512x320xf32, #tpu.memory_space<vmem>>, vector<512x320xf32>
    %cst = arith.constant dense<0.000000e+00> : vector<2x320xf32>
    %2 = tpu.matmul %0, %1, %cst {dimension_numbers = #tpu.dot_dimension_numbers<[1], [0], [0], [1], [0, 0, 1, 1], [], []>} : vector<2x512xf32>, vector<512x320xf32>, vector<2x320xf32> -> vector<2x320xf32>
    %c0_3 = arith.constant 0 : index
    %c0_4 = arith.constant 0 : index
    %3 = vector.load %arg2[%c0_3, %c0_4] : memref<1x320xf32, #tpu.memory_space<vmem>>, vector<1x320xf32>
    %4 = vector.broadcast %3 : vector<1x320xf32> to vector<2x320xf32>
    %5 = arith.addf %2, %4 : vector<2x320xf32>
    %cst_5 = arith.constant 0.000000e+00 : f32
    %6 = vector.broadcast %cst_5 : f32 to vector<2x320xf32>
    %7 = arith.maximumf %5, %6 : vector<2x320xf32>
    %c0_6 = arith.constant 0 : index
    %c0_7 = arith.constant 0 : index
    %8 = vector.load %arg3[%c0_6, %c0_7] : memref<320x320xf32, #tpu.memory_space<vmem>>, vector<320x320xf32>
    %cst_8 = arith.constant dense<0.000000e+00> : vector<2x320xf32>
    %9 = tpu.matmul %7, %8, %cst_8 {dimension_numbers = #tpu.dot_dimension_numbers<[1], [0], [0], [1], [0, 0, 1, 1], [], []>} : vector<2x320xf32>, vector<320x320xf32>, vector<2x320xf32> -> vector<2x320xf32>
    %c0_9 = arith.constant 0 : index
    %c0_10 = arith.constant 0 : index
    %10 = vector.load %arg4[%c0_9, %c0_10] : memref<1x320xf32, #tpu.memory_space<vmem>>, vector<1x320xf32>
    %11 = vector.broadcast %10 : vector<1x320xf32> to vector<2x320xf32>
    %12 = arith.addf %9, %11 : vector<2x320xf32>
    %cst_11 = arith.constant 0.000000e+00 : f32
    %13 = vector.broadcast %cst_11 : f32 to vector<2x320xf32>
    %14 = arith.maximumf %12, %13 : vector<2x320xf32>
    %c0_12 = arith.constant 0 : index
    %c0_13 = arith.constant 0 : index
    %15 = vector.load %arg5[%c0_12, %c0_13] : memref<320x128xf32, #tpu.memory_space<vmem>>, vector<320x128xf32>
    %cst_14 = arith.constant dense<0.000000e+00> : vector<2x128xf32>
    %16 = tpu.matmul %14, %15, %cst_14 {dimension_numbers = #tpu.dot_dimension_numbers<[1], [0], [0], [1], [0, 0, 1, 1], [], []>} : vector<2x320xf32>, vector<320x128xf32>, vector<2x128xf32> -> vector<2x128xf32>
    %c0_15 = arith.constant 0 : index
    %c0_16 = arith.constant 0 : index
    %17 = vector.load %arg6[%c0_15, %c0_16] : memref<1x128xf32, #tpu.memory_space<vmem>>, vector<1x128xf32>
    %18 = vector.broadcast %17 : vector<1x128xf32> to vector<2x128xf32>
    %19 = arith.addf %16, %18 : vector<2x128xf32>
    %c0_17 = arith.constant 0 : index
    %c0_18 = arith.constant 0 : index
    %20 = vector.load %arg7[%c0_17, %c0_18] : memref<2x128xf32, #tpu.memory_space<vmem>>, vector<2x128xf32>
    tpu.vector_store %arg7[%c0_17, %c0_18], %19 {strides = array<i32>} : memref<2x128xf32, #tpu.memory_space<vmem>>, vector<2x128xf32>,
    return
  }
}

</mosaic_0001>

<llo_original>
// kernel: tpu_custom_call.1
$region0: #{tpu_custom_call.1}
  #allocation0 [shape = 'u32[]', space=smem, size = 0x4, offset = 0x4, fixed_abs, tag = 'smem constant byte address 0x4 - core index']
  #allocation1 [shape = 'u32[144,128]{1,0:T(1,128)}', space=vmem, size = 0x12000, scoped, tag = 'internal scratch']
  %s0 = inlined_call_operand.vmem [shape: f32[2,512], index: 0, kind: input, shape index: {}]
  %s1 = inlined_call_operand.vmem [shape: f32[512,320], index: 1, kind: input, shape index: {}]
  %s2 = inlined_call_operand.vmem [shape: f32[1,320], index: 2, kind: input, shape index: {}]
  %s3 = inlined_call_operand.vmem [shape: f32[320,320], index: 3, kind: input, shape index: {}]
  %s4 = inlined_call_operand.vmem [shape: f32[1,320], index: 4, kind: input, shape index: {}]
  %s5 = inlined_call_operand.vmem [shape: f32[320,128], index: 5, kind: input, shape index: {}]
  %s6 = inlined_call_operand.vmem [shape: f32[1,128], index: 6, kind: input, shape index: {}]
  %s7 = inlined_call_operand.hbm [shape: f32[2,128], index: 7, kind: output, shape index: {}]
  %s8 = sld [smem:[#allocation0]]
  $region38: #{tpu_custom_call.1} parent=0
    _
  %s10 = ssub.s32 1, %s8
  %s11 = scalar_select 0, %s10, %s8
  $region1: #{tpu_custom_call.1} parent=0
    #allocation2 [shape = 'u8[1024]{0}', space=vmem, size = 0x400, scoped, tag = 'output window, operand 0, single buffered']
    #allocation3 [shape = 's32[1]{0}', space=sflag, size = 0x4, scoped, tag = 'scoped memory for tpu_custom_call.1']
    %12 = vsyncpa [#allocation3], 0
    // Predicated region
    $region2: #{tpu_custom_call.1} parent=1 // pred_check
      _
    $region3: #{tpu_custom_call.1} parent=1 // pred_check_branch
      %14 = sbr.rel (0) target = $region5
    $region4: #{tpu_custom_call.1} parent=1 // pred_region
      _
    $region5: #{tpu_custom_call.1} parent=1 // pred_fallthru
      _
    // Predicated region
    $region6: #{tpu_custom_call.1} parent=1 // pred_check
      _
    $region7: #{tpu_custom_call.1} parent=1 // pred_check_branch
      %16 = sbr.rel (0) target = $region9
    $region8: #{tpu_custom_call.1} parent=1 // pred_region
      _
    $region9: #{tpu_custom_call.1} parent=1 // pred_fallthru
      _
    // Predicated region
    $region10: #{tpu_custom_call.1} parent=1 // pred_check
      _
    $region11: #{tpu_custom_call.1} parent=1 // pred_check_branch
      %18 = sbr.rel (0) target = $region13
    $region12: #{tpu_custom_call.1} parent=1 // pred_region
      _
    $region13: #{tpu_custom_call.1} parent=1 // pred_fallthru
      _
    // Predicated region
    $region14: #{tpu_custom_call.1} parent=1 // pred_check
      _
    $region15: #{tpu_custom_call.1} parent=1 // pred_check_branch
      %20 = sbr.rel (0) target = $region17
    $region16: #{tpu_custom_call.1} parent=1 // pred_region
      _
    $region17: #{tpu_custom_call.1} parent=1 // pred_fallthru
      _
    // Predicated region
    $region18: #{tpu_custom_call.1} parent=1 // pred_check
      _
    $region19: #{tpu_custom_call.1} parent=1 // pred_check_branch
      %22 = sbr.rel (0) target = $region21
    $region20: #{tpu_custom_call.1} parent=1 // pred_region
      _
    $region21: #{tpu_custom_call.1} parent=1 // pred_fallthru
      _
    // Predicated region
    $region22: #{tpu_custom_call.1} parent=1 // pred_check
      _
    $region23: #{tpu_custom_call.1} parent=1 // pred_check_branch
      %24 = sbr.rel (0) target = $region25
    $region24: #{tpu_custom_call.1} parent=1 // pred_region
      _
    $region25: #{tpu_custom_call.1} parent=1 // pred_fallthru
      _
    // Predicated region
    $region26: #{tpu_custom_call.1} parent=1 // pred_check
      _
    $region27: #{tpu_custom_call.1} parent=1 // pred_check_branch
      %26 = sbr.rel (0) target = $region29
    $region28: #{tpu_custom_call.1} parent=1 // pred_region
      _
    $region29: #{tpu_custom_call.1} parent=1 // pred_fallthru
      _
    %v27 = vld [vmem:[%s0] sm:$0xff]
    %v28 = vld [vmem:[%s1] sm:$0xff]
    %v29 = vld [vmem:[%s1 + $0x8] sm:$0xff]
    %v30 = vld [vmem:[%s1 + $0x10] sm:$0xff]
    %v31 = vld [vmem:[%s1 + $0x18] sm:$0xff]
    %v32 = vld [vmem:[%s1 + $0x20] sm:$0xff]
    %v33 = vld [vmem:[%s1 + $0x28] sm:$0xff]
    %v34 = vld [vmem:[%s1 + $0x30] sm:$0xff]
    %v35 = vld [vmem:[%s1 + $0x38] sm:$0xff]
    %v36 = vld [vmem:[%s1 + $0x40] sm:$0xff]
    %v37 = vld [vmem:[%s1 + $0x48] sm:$0xff]
    %v38 = vld [vmem:[%s1 + $0x50] sm:$0xff]
    %v39 = vld [vmem:[%s1 + $0x58] sm:$0xff]
    %v40 = vld [vmem:[%s1 + $0x60] sm:$0xff]
    %v41 = vld [vmem:[%s1 + $0x68] sm:$0xff]
    %v42 = vld [vmem:[%s1 + $0x70] sm:$0xff]
    %v43 = vld [vmem:[%s1 + $0x78] sm:$0xff]
    %v44 = vld [vmem:[%s1 + $0x80] sm:$0xff]
    %v45 = vld [vmem:[%s1 + $0x88] sm:$0xff]
    %v46 = vld [vmem:[%s1 + $0x90] sm:$0xff]
    %v47 = vld [vmem:[%s1 + $0x98] sm:$0xff]
    %v48 = vld [vmem:[%s1 + $0xa0] sm:$0xff]
    %v49 = vld [vmem:[%s1 + $0xa8] sm:$0xff]
    %v50 = vld [vmem:[%s1 + $0xb0] sm:$0xff]
    %v51 = vld [vmem:[%s1 + $0xb8] sm:$0xff]
    %v52 = vld [vmem:[%s1 + $0xc0] sm:$0xff]
    %v53 = vld [vmem:[%s1 + $0xc8] sm:$0xff]
    %v54 = vld [vmem:[%s1 + $0xd0] sm:$0xff]
    %v55 = vld [vmem:[%s1 + $0xd8] sm:$0xff]
    %v56 = vld [vmem:[%s1 + $0xe0] sm:$0xff]
    %v57 = vld [vmem:[%s1 + $0xe8] sm:$0xff]
    %v58 = vld [vmem:[%s1 + $0xf0] sm:$0xff]
    %v59 = vld [vmem:[%s1 + $0xf8] sm:$0xff]
    %v60 = vld [vmem:[%s1 + $0x100] sm:$0xff]
    %v61 = vld [vmem:[%s1 + $0x108] sm:$0xff]
    %v62 = vld [vmem:[%s1 + $0x110] sm:$0xff]
    %v63 = vld [vmem:[%s1 + $0x118] sm:$0xff]
    %v64 = vld [vmem:[%s1 + $0x120] sm:$0xff]
    %v65 = vld [vmem:[%s1 + $0x128] sm:$0xff]
    %v66 = vld [vmem:[%s1 + $0x130] sm:$0xff]
    %v67 = vld [vmem:[%s1 + $0x138] sm:$0xff]
    %v68 = vld [vmem:[%s1 + $0x140] sm:$0xff]
    %v69 = vld [vmem:[%s1 + $0x148] sm:$0xff]
    %v70 = vld [vmem:[%s1 + $0x150] sm:$0xff]
    %v71 = vld [vmem:[%s1 + $0x158] sm:$0xff]
    %v72 = vld [vmem:[%s1 + $0x160] sm:$0xff]
    %v73 = vld [vmem:[%s1 + $0x168] sm:$0xff]
    %v74 = vld [vmem:[%s1 + $0x170] sm:$0xff]
    %v75 = vld [vmem:[%s1 + $0x178] sm:$0xff]
    %v76 = vld [vmem:[%s1 + $0x180] sm:$0xff]
    %v77 = vld [vmem:[%s1 + $0x188] sm:$0xff]
    %v78 = vld [vmem:[%s1 + $0x190] sm:$0xff]
    %v79 = vld [vmem:[%s1 + $0x198] sm:$0xff]
    %v80 = vld [vmem:[%s1 + $0x1a0] sm:$0xff]
    %v81 = vld [vmem:[%s1 + $0x1a8] sm:$0xff]
    %v82 = vld [vmem:[%s1 + $0x1b0] sm:$0xff]
    %v83 = vld [vmem:[%s1 + $0x1b8] sm:$0xff]
    %v84 = vld [vmem:[%s1 + $0x1c0] sm:$0xff]
    %v85 = vld [vmem:[%s1 + $0x1c8] sm:$0xff]
    %v86 = vld [vmem:[%s1 + $0x1d0] sm:$0xff]
    %v87 = vld [vmem:[%s1 + $0x1d8] sm:$0xff]
    %v88 = vld [vmem:[%s1 + $0x1e0] sm:$0xff]
    %v89 = vld [vmem:[%s1 + $0x1e8] sm:$0xff]
    %v90 = vld [vmem:[%s1 + $0x1f0] sm:$0xff]
    %v91 = vld [vmem:[%s1 + $0x1f8] sm:$0xff]
    %v92 = vld [vmem:[%s1 + $0x200] sm:$0xff]
    %v93 = vld [vmem:[%s1 + $0x208] sm:$0xff]
    %v94 = vld [vmem:[%s1 + $0x210] sm:$0xff]
    %v95 = vld [vmem:[%s1 + $0x218] sm:$0xff]
    %v96 = vld [vmem:[%s1 + $0x220] sm:$0xff]
    %v97 = vld [vmem:[%s1 + $0x228] sm:$0xff]
    %v98 = vld [vmem:[%s1 + $0x230] sm:$0xff]
    %v99 = vld [vmem:[%s1 + $0x238] sm:$0xff]
    %v100 = vld [vmem:[%s1 + $0x240] sm:$0xff]
    %v101 = vld [vmem:[%s1 + $0x248] sm:$0xff]
    %v102 = vld [vmem:[%s1 + $0x250] sm:$0xff]
    %v103 = vld [vmem:[%s1 + $0x258] sm:$0xff]
    %v104 = vld [vmem:[%s1 + $0x260] sm:$0xff]
    %v105 = vld [vmem:[%s1 + $0x268] sm:$0xff]
    %v106 = vld [vmem:[%s1 + $0x270] sm:$0xff]
    %v107 = vld [vmem:[%s1 + $0x278] sm:$0xff]
    %v108 = vld [vmem:[%s1 + $0x280] sm:$0xff]
    %v109 = vld [vmem:[%s1 + $0x288] sm:$0xff]
    %v110 = vld [vmem:[%s1 + $0x290] sm:$0xff]
    %v111 = vld [vmem:[%s1 + $0x298] sm:$0xff]
    %v112 = vld [vmem:[%s1 + $0x2a0] sm:$0xff]
    %v113 = vld [vmem:[%s1 + $0x2a8] sm:$0xff]
    %v114 = vld [vmem:[%s1 + $0x2b0] sm:$0xff]
    %v115 = vld [vmem:[%s1 + $0x2b8] sm:$0xff]
    %v116 = vld [vmem:[%s1 + $0x2c0] sm:$0xff]
    %v117 = vld [vmem:[%s1 + $0x2c8] sm:$0xff]
    %v118 = vld [vmem:[%s1 + $0x2d0] sm:$0xff]
    %v119 = vld [vmem:[%s1 + $0x2d8] sm:$0xff]
    %v120 = vld [vmem:[%s1 + $0x2e0] sm:$0xff]
    %v121 = vld [vmem:[%s1 + $0x2e8] sm:$0xff]
    %v122 = vld [vmem:[%s1 + $0x2f0] sm:$0xff]
    %v123 = vld [vmem:[%s1 + $0x2f8] sm:$0xff]
    %v124 = vld [vmem:[%s1 + $0x300] sm:$0xff]
    %v125 = vld [vmem:[%s1 + $0x308] sm:$0xff]
    %v126 = vld [vmem:[%s1 + $0x310] sm:$0xff]
    %v127 = vld [vmem:[%s1 + $0x318] sm:$0xff]
    %v128 = vld [vmem:[%s1 + $0x320] sm:$0xff]
    %v129 = vld [vmem:[%s1 + $0x328] sm:$0xff]
    %v130 = vld [vmem:[%s1 + $0x330] sm:$0xff]
    %v131 = vld [vmem:[%s1 + $0x338] sm:$0xff]
    %v132 = vld [vmem:[%s1 + $0x340] sm:$0xff]
    %v133 = vld [vmem:[%s1 + $0x348] sm:$0xff]
    %v134 = vld [vmem:[%s1 + $0x350] sm:$0xff]
    %v135 = vld [vmem:[%s1 + $0x358] sm:$0xff]
    %v136 = vld [vmem:[%s1 + $0x360] sm:$0xff]
    %v137 = vld [vmem:[%s1 + $0x368] sm:$0xff]
    %v138 = vld [vmem:[%s1 + $0x370] sm:$0xff]
    %v139 = vld [vmem:[%s1 + $0x378] sm:$0xff]
    %v140 = vld [vmem:[%s1 + $0x380] sm:$0xff]
    %v141 = vld [vmem:[%s1 + $0x388] sm:$0xff]
    %v142 = vld [vmem:[%s1 + $0x390] sm:$0xff]
    %v143 = vld [vmem:[%s1 + $0x398] sm:$0xff]
    %v144 = vld [vmem:[%s1 + $0x3a0] sm:$0xff]
    %v145 = vld [vmem:[%s1 + $0x3a8] sm:$0xff]
    %v146 = vld [vmem:[%s1 + $0x3b0] sm:$0xff]
    %v147 = vld [vmem:[%s1 + $0x3b8] sm:$0xff]
    %v148 = vld [vmem:[%s1 + $0x3c0] sm:$0xff]
    %v149 = vld [vmem:[%s1 + $0x3c8] sm:$0xff]
    %v150 = vld [vmem:[%s1 + $0x3d0] sm:$0xff]
    %v151 = vld [vmem:[%s1 + $0x3d8] sm:$0xff]
    %v152 = vld [vmem:[%s1 + $0x3e0] sm:$0xff]
    %v153 = vld [vmem:[%s1 + $0x3e8] sm:$0xff]
    %v154 = vld [vmem:[%s1 + $0x3f0] sm:$0xff]
    %v155 = vld [vmem:[%s1 + $0x3f8] sm:$0xff]
    %v156 = vld [vmem:[%s1 + $0x400] sm:$0xff]
    %v157 = vld [vmem:[%s1 + $0x408] sm:$0xff]
    %v158 = vld [vmem:[%s1 + $0x410] sm:$0xff]
    %v159 = vld [vmem:[%s1 + $0x418] sm:$0xff]
    %v160 = vld [vmem:[%s1 + $0x420] sm:$0xff]
    %v161 = vld [vmem:[%s1 + $0x428] sm:$0xff]
    %v162 = vld [vmem:[%s1 + $0x430] sm:$0xff]
    %v163 = vld [vmem:[%s1 + $0x438] sm:$0xff]
    %v164 = vld [vmem:[%s1 + $0x440] sm:$0xff]
    %v165 = vld [vmem:[%s1 + $0x448] sm:$0xff]
    %v166 = vld [vmem:[%s1 + $0x450] sm:$0xff]
    %v167 = vld [vmem:[%s1 + $0x458] sm:$0xff]
    %v168 = vld [vmem:[%s1 + $0x460] sm:$0xff]
    %v169 = vld [vmem:[%s1 + $0x468] sm:$0xff]
    %v170 = vld [vmem:[%s1 + $0x470] sm:$0xff]
    %v171 = vld [vmem:[%s1 + $0x478] sm:$0xff]
    %v172 = vld [vmem:[%s1 + $0x480] sm:$0xff]
    %v173 = vld [vmem:[%s1 + $0x488] sm:$0xff]
    %v174 = vld [vmem:[%s1 + $0x490] sm:$0xff]
    %v175 = vld [vmem:[%s1 + $0x498] sm:$0xff]
    %v176 = vld [vmem:[%s1 + $0x4a0] sm:$0xff]
    %v177 = vld [vmem:[%s1 + $0x4a8] sm:$0xff]
    %v178 = vld [vmem:[%s1 + $0x4b0] sm:$0xff]
    %v179 = vld [vmem:[%s1 + $0x4b8] sm:$0xff]
    %v180 = vld [vmem:[%s1 + $0x4c0] sm:$0xff]
    %v181 = vld [vmem:[%s1 + $0x4c8] sm:$0xff]
    %v182 = vld [vmem:[%s1 + $0x4d0] sm:$0xff]
    %v183 = vld [vmem:[%s1 + $0x4d8] sm:$0xff]
    %v184 = vld [vmem:[%s1 + $0x4e0] sm:$0xff]
    %v185 = vld [vmem:[%s1 + $0x4e8] sm:$0xff]
    %v186 = vld [vmem:[%s1 + $0x4f0] sm:$0xff]
    %v187 = vld [vmem:[%s1 + $0x4f8] sm:$0xff]
    %v188 = vld [vmem:[%s1 + $0x500] sm:$0xff]
    %v189 = vld [vmem:[%s1 + $0x508] sm:$0xff]
    %v190 = vld [vmem:[%s1 + $0x510] sm:$0xff]
    %v191 = vld [vmem:[%s1 + $0x518] sm:$0xff]
    %v192 = vld [vmem:[%s1 + $0x520] sm:$0xff]
    %v193 = vld [vmem:[%s1 + $0x528] sm:$0xff]
    %v194 = vld [vmem:[%s1 + $0x530] sm:$0xff]
    %v195 = vld [vmem:[%s1 + $0x538] sm:$0xff]
    %v196 = vld [vmem:[%s1 + $0x540] sm:$0xff]
    %v197 = vld [vmem:[%s1 + $0x548] sm:$0xff]
    %v198 = vld [vmem:[%s1 + $0x550] sm:$0xff]
    %v199 = vld [vmem:[%s1 + $0x558] sm:$0xff]
    %v200 = vld [vmem:[%s1 + $0x560] sm:$0xff]
    %v201 = vld [vmem:[%s1 + $0x568] sm:$0xff]
    %v202 = vld [vmem:[%s1 + $0x570] sm:$0xff]
    %v203 = vld [vmem:[%s1 + $0x578] sm:$0xff]
    %v204 = vld [vmem:[%s1 + $0x580] sm:$0xff]
    %v205 = vld [vmem:[%s1 + $0x588] sm:$0xff]
    %v206 = vld [vmem:[%s1 + $0x590] sm:$0xff]
    %v207 = vld [vmem:[%s1 + $0x598] sm:$0xff]
    %v208 = vld [vmem:[%s1 + $0x5a0] sm:$0xff]
    %v209 = vld [vmem:[%s1 + $0x5a8] sm:$0xff]
    %v210 = vld [vmem:[%s1 + $0x5b0] sm:$0xff]
    %v211 = vld [vmem:[%s1 + $0x5b8] sm:$0xff]
    %v212 = vld [vmem:[%s1 + $0x5c0] sm:$0xff]
    %v213 = vld [vmem:[%s1 + $0x5c8] sm:$0xff]
    %v214 = vld [vmem:[%s1 + $0x5d0] sm:$0xff]
    %v215 = vld [vmem:[%s1 + $0x5d8] sm:$0xff]
    %v216 = vld [vmem:[%s1 + $0x5e0] sm:$0xff]
    %v217 = vld [vmem:[%s1 + $0x5e8] sm:$0xff]
    %v218 = vld [vmem:[%s1 + $0x5f0] sm:$0xff]
    %v219 = vld [vmem:[%s1 + $0x5f8] sm:$0xff]
    %v220 = vld [vmem:[%s2] sm:$0x7]
    %v222 = vlaneseq
    %v223 = vshrl.u32 %v222, 7
    %v224 = vsub.s32 0, %v223
    %v225 = vrot.slane %v220, %v224
    %v226 = vlaneseq
    %v227 = vshrl.u32 %v226, 7
    %v228 = vsub.s32 1, %v227
    %v229 = vrot.slane %v220, %v228
    %v230 = vlaneseq
    %v231 = vshrl.u32 %v230, 7
    %v232 = vsub.s32 2, %v231
    %v233 = vrot.slane %v220, %v232
    %v238 = vcombine.high %v27, %v27
    %v240 = vunpack.c.l.s4 1983009808
    %v241 = vunpack.c.0.s8 %v240
    %v242 = vlaneseq
    %v243 = vshrl.u32 %v242, 7
    %v244 = vsub.s32 %v241, %v243
    %v245 = vrot.slane %v27, %v244
    %v247 = vunpack.c.l.s4 1983009808
    %v248 = vunpack.c.0.s8 %v247
    %v249 = vlaneseq
    %v250 = vshrl.u32 %v249, 7
    %v251 = vsub.s32 %v248, %v250
    %v252 = vrot.slane %v238, %v251
    %v253 = vcombine.high %v245, %v245
    %v254 = vcombine.high %v252, %v252
    %259 = vmatprep.subr.mxu0 %v74
    %260 = vmatpush1.msra.mxu0 %v73
    %261 = vmatprep.subr.mxu0 %v71
    %262 = vmatpush1.msra.mxu0 %v70
    %263 = vmatprep.subr.mxu0 %v68
    %264 = vmatpush1.msra.mxu0 %v67
    %265 = vmatprep.subr.mxu0 %v65
    %266 = vmatpush1.msra.mxu0 %v64
    %267 = vmatprep.subr.mxu0 %v62
    %268 = vmatpush1.msra.mxu0 %v61
    %269 = vmatprep.subr.mxu0 %v59
    %270 = vmatpush1.msra.mxu0 %v58
    %271 = vmatprep.subr.mxu0 %v56
    %272 = vmatpush1.msra.mxu0 %v55
    %273 = vmatprep.subr.mxu0 %v53
    %274 = vmatpush1.msra.mxu0 %v52
    %275 = vmatprep.subr.mxu0 %v50
    %276 = vmatpush1.msra.mxu0 %v49
    %277 = vmatprep.subr.mxu0 %v47
    %278 = vmatpush1.msra.mxu0 %v46
    %279 = vmatprep.subr.mxu0 %v44
    %280 = vmatpush1.msra.mxu0 %v43
    %281 = vmatprep.subr.mxu0 %v41
    %282 = vmatpush1.msra.mxu0 %v40
    %283 = vmatprep.subr.mxu0 %v38
    %284 = vmatpush1.msra.mxu0 %v37
    %285 = vmatprep.subr.mxu0 %v35
    %286 = vmatpush1.msra.mxu0 %v34
    %287 = vmatprep.subr.mxu0 %v32
    %288 = vmatpush1.msra.mxu0 %v31
    %289 = vmatprep.subr.mxu0 %v29
    %290 = vmatpush1.msra.mxu0 %v28
    %291 = vmatprep.subr.mxu0 %v122
    %292 = vmatpush2.msra.mxu0 %v121
    %293 = vmatprep.subr.mxu0 %v119
    %294 = vmatpush2.msra.mxu0 %v118
    %295 = vmatprep.subr.mxu0 %v116
    %296 = vmatpush2.msra.mxu0 %v115
    %297 = vmatprep.subr.mxu0 %v113
    %298 = vmatpush2.msra.mxu0 %v112
    %299 = vmatprep.subr.mxu0 %v110
    %300 = vmatpush2.msra.mxu0 %v109
    %301 = vmatprep.subr.mxu0 %v107
    %302 = vmatpush2.msra.mxu0 %v106
    %303 = vmatprep.subr.mxu0 %v104
    %304 = vmatpush2.msra.mxu0 %v103
    %305 = vmatprep.subr.mxu0 %v101
    %306 = vmatpush2.msra.mxu0 %v100
    %307 = vmatprep.subr.mxu0 %v98
    %308 = vmatpush2.msra.mxu0 %v97
    %309 = vmatprep.subr.mxu0 %v95
    %310 = vmatpush2.msra.mxu0 %v94
    %311 = vmatprep.subr.mxu0 %v92
    %312 = vmatpush2.msra.mxu0 %v91
    %313 = vmatprep.subr.mxu0 %v89
    %314 = vmatpush2.msra.mxu0 %v88
    %315 = vmatprep.subr.mxu0 %v86
    %316 = vmatpush2.msra.mxu0 %v85
    %317 = vmatprep.subr.mxu0 %v83
    %318 = vmatpush2.msra.mxu0 %v82
    %319 = vmatprep.subr.mxu0 %v80
    %320 = vmatpush2.msra.mxu0 %v79
    %321 = vmatprep.subr.mxu0 %v77
    %322 = vmatpush2.msra.mxu0 %v76
    %323 = vmatprep.mubr.f32.mxu0 %v253
    %324 = vmatmul.mubr.f32.gmra.mxu0 %v245
    %v325 = vpop.f32.mrf.mxu0
    %v326 = vadd.f32 %v225, %v325
    %v327 = vpop.f32.mrf.mxu0
    %v328 = vadd.f32 %v229, %v327
    %329 = vdwg.mxu0
    %330 = vmatprep.subr.mxu0 %v170
    %331 = vmatpush1.msra.mxu0 %v169
    %332 = vmatprep.subr.mxu0 %v167
    %333 = vmatpush1.msra.mxu0 %v166
    %334 = vmatprep.subr.mxu0 %v164
    %335 = vmatpush1.msra.mxu0 %v163
    %336 = vmatprep.subr.mxu0 %v161
    %337 = vmatpush1.msra.mxu0 %v160
    %338 = vmatprep.subr.mxu0 %v158
    %339 = vmatpush1.msra.mxu0 %v157
    %340 = vmatprep.subr.mxu0 %v155
    %341 = vmatpush1.msra.mxu0 %v154
    %342 = vmatprep.subr.mxu0 %v152
    %343 = vmatpush1.msra.mxu0 %v151
    %344 = vmatprep.subr.mxu0 %v149
    %345 = vmatpush1.msra.mxu0 %v148
    %346 = vmatprep.subr.mxu0 %v146
    %347 = vmatpush1.msra.mxu0 %v145
    %348 = vmatprep.subr.mxu0 %v143
    %349 = vmatpush1.msra.mxu0 %v142
    %350 = vmatprep.subr.mxu0 %v140
    %351 = vmatpush1.msra.mxu0 %v139
    %352 = vmatprep.subr.mxu0 %v137
    %353 = vmatpush1.msra.mxu0 %v136
    %354 = vmatprep.subr.mxu0 %v134
    %355 = vmatpush1.msra.mxu0 %v133
    %356 = vmatprep.subr.mxu0 %v131
    %357 = vmatpush1.msra.mxu0 %v130
    %358 = vmatprep.subr.mxu0 %v128
    %359 = vmatpush1.msra.mxu0 %v127
    %360 = vmatprep.subr.mxu0 %v125
    %361 = vmatpush1.msra.mxu0 %v124
    %362 = vmatprep.subr.mxu0 %v218
    %363 = vmatpush2.msra.mxu0 %v217
    %364 = vmatprep.subr.mxu0 %v215
    %365 = vmatpush2.msra.mxu0 %v214
    %366 = vmatprep.subr.mxu0 %v212
    %367 = vmatpush2.msra.mxu0 %v211
    %368 = vmatprep.subr.mxu0 %v209
    %369 = vmatpush2.msra.mxu0 %v208
    %370 = vmatprep.subr.mxu0 %v206
    %371 = vmatpush2.msra.mxu0 %v205
    %372 = vmatprep.subr.mxu0 %v203
    %373 = vmatpush2.msra.mxu0 %v202
    %374 = vmatprep.subr.mxu0 %v200
    %375 = vmatpush2.msra.mxu0 %v199
    %376 = vmatprep.subr.mxu0 %v197
    %377 = vmatpush2.msra.mxu0 %v196
    %378 = vmatprep.subr.mxu0 %v194
    %379 = vmatpush2.msra.mxu0 %v193
    %380 = vmatprep.subr.mxu0 %v191
    %381 = vmatpush2.msra.mxu0 %v190
    %382 = vmatprep.subr.mxu0 %v188
    %383 = vmatpush2.msra.mxu0 %v187
    %384 = vmatprep.subr.mxu0 %v185
    %385 = vmatpush2.msra.mxu0 %v184
    %386 = vmatprep.subr.mxu0 %v182
    %387 = vmatpush2.msra.mxu0 %v181
    %388 = vmatprep.subr.mxu0 %v179
    %389 = vmatpush2.msra.mxu0 %v178
    %390 = vmatprep.subr.mxu0 %v176
    %391 = vmatpush2.msra.mxu0 %v175
    %392 = vmatprep.subr.mxu0 %v173
    %393 = vmatpush2.msra.mxu0 %v172
    %394 = vmatprep.mubr.f32.mxu0 %v254
    %395 = vmatmul.mubr.f32.gmra.mxu0 %v252
    %v396 = vpop.f32.mrf.mxu0
    %v397 = vadd.f32 %v326, %v396
    %v398 = vpop.f32.mrf.mxu0
    %v399 = vadd.f32 %v328, %v398
    %400 = vdwg.mxu0
    %401 = vmatprep.subr.mxu0 0.0
    %402 = vmatpush1.msra.mxu0 %v75
    %403 = vmatprep.subr.mxu0 0.0
    %404 = vmatpush1.msra.mxu0 %v72
    %405 = vmatprep.subr.mxu0 0.0
    %406 = vmatpush1.msra.mxu0 %v69
    %407 = vmatprep.subr.mxu0 0.0
    %408 = vmatpush1.msra.mxu0 %v66
    %409 = vmatprep.subr.mxu0 0.0
    %410 = vmatpush1.msra.mxu0 %v63
    %411 = vmatprep.subr.mxu0 0.0
    %412 = vmatpush1.msra.mxu0 %v60
    %413 = vmatprep.subr.mxu0 0.0
    %414 = vmatpush1.msra.mxu0 %v57
    %415 = vmatprep.subr.mxu0 0.0
    %416 = vmatpush1.msra.mxu0 %v54
    %417 = vmatprep.subr.mxu0 0.0
    %418 = vmatpush1.msra.mxu0 %v51
    %419 = vmatprep.subr.mxu0 0.0
    %420 = vmatpush1.msra.mxu0 %v48
    %421 = vmatprep.subr.mxu0 0.0
    %422 = vmatpush1.msra.mxu0 %v45
    %423 = vmatprep.subr.mxu0 0.0
    %424 = vmatpush1.msra.mxu0 %v42
    %425 = vmatprep.subr.mxu0 0.0
    %426 = vmatpush1.msra.mxu0 %v39
    %427 = vmatprep.subr.mxu0 0.0
    %428 = vmatpush1.msra.mxu0 %v36
    %429 = vmatprep.subr.mxu0 0.0
    %430 = vmatpush1.msra.mxu0 %v33
    %431 = vmatprep.subr.mxu0 0.0
    %432 = vmatpush1.msra.mxu0 %v30
    %433 = vmatprep.subr.mxu0 0.0
    %434 = vmatpush2.msra.mxu0 %v123
    %435 = vmatprep.subr.mxu0 0.0
    %436 = vmatpush2.msra.mxu0 %v120
    %437 = vmatprep.subr.mxu0 0.0
    %438 = vmatpush2.msra.mxu0 %v117
    %439 = vmatprep.subr.mxu0 0.0
    %440 = vmatpush2.msra.mxu0 %v114
    %441 = vmatprep.subr.mxu0 0.0
    %442 = vmatpush2.msra.mxu0 %v111
    %443 = vmatprep.subr.mxu0 0.0
    %444 = vmatpush2.msra.mxu0 %v108
    %445 = vmatprep.subr.mxu0 0.0
    %446 = vmatpush2.msra.mxu0 %v105
    %447 = vmatprep.subr.mxu0 0.0
    %448 = vmatpush2.msra.mxu0 %v102
    %449 = vmatprep.subr.mxu0 0.0
    %450 = vmatpush2.msra.mxu0 %v99
    %451 = vmatprep.subr.mxu0 0.0
    %452 = vmatpush2.msra.mxu0 %v96
    %453 = vmatprep.subr.mxu0 0.0
    %454 = vmatpush2.msra.mxu0 %v93
    %455 = vmatprep.subr.mxu0 0.0
    %456 = vmatpush2.msra.mxu0 %v90
    %457 = vmatprep.subr.mxu0 0.0
    %458 = vmatpush2.msra.mxu0 %v87
    %459 = vmatprep.subr.mxu0 0.0
    %460 = vmatpush2.msra.mxu0 %v84
    %461 = vmatprep.subr.mxu0 0.0
    %462 = vmatpush2.msra.mxu0 %v81
    %463 = vmatprep.subr.mxu0 0.0
    %464 = vmatpush2.msra.mxu0 %v78
    %465 = vmatprep.mubr.f32.mxu0 %v253
    %466 = vmatmul.mubr.f32.gmra.mxu0 %v245
    %v467 = vpop.f32.mrf.mxu0
    %v468 = vadd.f32 %v233, %v467
    %v469 = vpop.f32.mrf.mxu0
    %470 = vdwg.mxu0
    %471 = vmatprep.subr.mxu0 0.0
    %472 = vmatpush1.msra.mxu0 %v171
    %473 = vmatprep.subr.mxu0 0.0
    %474 = vmatpush1.msra.mxu0 %v168
    %475 = vmatprep.subr.mxu0 0.0
    %476 = vmatpush1.msra.mxu0 %v165
    %477 = vmatprep.subr.mxu0 0.0
    %478 = vmatpush1.msra.mxu0 %v162
    %479 = vmatprep.subr.mxu0 0.0
    %480 = vmatpush1.msra.mxu0 %v159
    %481 = vmatprep.subr.mxu0 0.0
    %482 = vmatpush1.msra.mxu0 %v156
    %483 = vmatprep.subr.mxu0 0.0
    %484 = vmatpush1.msra.mxu0 %v153
    %485 = vmatprep.subr.mxu0 0.0
    %486 = vmatpush1.msra.mxu0 %v150
    %487 = vmatprep.subr.mxu0 0.0
    %488 = vmatpush1.msra.mxu0 %v147
    %489 = vmatprep.subr.mxu0 0.0
    %490 = vmatpush1.msra.mxu0 %v144
    %491 = vmatprep.subr.mxu0 0.0
    %492 = vmatpush1.msra.mxu0 %v141
    %493 = vmatprep.subr.mxu0 0.0
    %494 = vmatpush1.msra.mxu0 %v138
    %495 = vmatprep.subr.mxu0 0.0
    %496 = vmatpush1.msra.mxu0 %v135
    %497 = vmatprep.subr.mxu0 0.0
    %498 = vmatpush1.msra.mxu0 %v132
    %499 = vmatprep.subr.mxu0 0.0
    %500 = vmatpush1.msra.mxu0 %v129
    %501 = vmatprep.subr.mxu0 0.0
    %502 = vmatpush1.msra.mxu0 %v126
    %503 = vmatprep.subr.mxu0 0.0
    %504 = vmatpush2.msra.mxu0 %v219
    %505 = vmatprep.subr.mxu0 0.0
    %506 = vmatpush2.msra.mxu0 %v216
    %507 = vmatprep.subr.mxu0 0.0
    %508 = vmatpush2.msra.mxu0 %v213
    %509 = vmatprep.subr.mxu0 0.0
    %510 = vmatpush2.msra.mxu0 %v210
    %511 = vmatprep.subr.mxu0 0.0
    %512 = vmatpush2.msra.mxu0 %v207
    %513 = vmatprep.subr.mxu0 0.0
    %514 = vmatpush2.msra.mxu0 %v204
    %515 = vmatprep.subr.mxu0 0.0
    %516 = vmatpush2.msra.mxu0 %v201
    %517 = vmatprep.subr.mxu0 0.0
    %518 = vmatpush2.msra.mxu0 %v198
    %519 = vmatprep.subr.mxu0 0.0
    %520 = vmatpush2.msra.mxu0 %v195
    %521 = vmatprep.subr.mxu0 0.0
    %522 = vmatpush2.msra.mxu0 %v192
    %523 = vmatprep.subr.mxu0 0.0
    %524 = vmatpush2.msra.mxu0 %v189
    %525 = vmatprep.subr.mxu0 0.0
    %526 = vmatpush2.msra.mxu0 %v186
    %527 = vmatprep.subr.mxu0 0.0
    %528 = vmatpush2.msra.mxu0 %v183
    %529 = vmatprep.subr.mxu0 0.0
    %530 = vmatpush2.msra.mxu0 %v180
    %531 = vmatprep.subr.mxu0 0.0
    %532 = vmatpush2.msra.mxu0 %v177
    %533 = vmatprep.subr.mxu0 0.0
    %534 = vmatpush2.msra.mxu0 %v174
    %535 = vmatprep.mubr.f32.mxu0 %v254
    %536 = vmatmul.mubr.f32.gmra.mxu0 %v252
    %v537 = vpop.f32.mrf.mxu0
    %v538 = vadd.f32 %v468, %v537
    %v539 = vpop.f32.mrf.mxu0
    %540 = vdwg.mxu0
    %v541 = vmax.f32 %v397, 0.0
    %v542 = vmax.f32 %v399, 0.0
    %v543 = vmax.f32 %v538, 0.0
    %v544 = vld [vmem:[%s3] sm:$0xff]
    %v545 = vld [vmem:[%s3 + $0x8] sm:$0xff]
    %v546 = vld [vmem:[%s3 + $0x10] sm:$0xff]
    %v547 = vld [vmem:[%s3 + $0x18] sm:$0xff]
    %v548 = vld [vmem:[%s3 + $0x20] sm:$0xff]
    %v549 = vld [vmem:[%s3 + $0x28] sm:$0xff]
    %v550 = vld [vmem:[%s3 + $0x30] sm:$0xff]
    %v551 = vld [vmem:[%s3 + $0x38] sm:$0xff]
    %v552 = vld [vmem:[%s3 + $0x40] sm:$0xff]
    %v553 = vld [vmem:[%s3 + $0x48] sm:$0xff]
    %v554 = vld [vmem:[%s3 + $0x50] sm:$0xff]
    %v555 = vld [vmem:[%s3 + $0x58] sm:$0xff]
    %v556 = vld [vmem:[%s3 + $0x60] sm:$0xff]
    %v557 = vld [vmem:[%s3 + $0x68] sm:$0xff]
    %v558 = vld [vmem:[%s3 + $0x70] sm:$0xff]
    %v559 = vld [vmem:[%s3 + $0x78] sm:$0xff]
    %v560 = vld [vmem:[%s3 + $0x80] sm:$0xff]
    %v561 = vld [vmem:[%s3 + $0x88] sm:$0xff]
    %v562 = vld [vmem:[%s3 + $0x90] sm:$0xff]
    %v563 = vld [vmem:[%s3 + $0x98] sm:$0xff]
    %v564 = vld [vmem:[%s3 + $0xa0] sm:$0xff]
    %v565 = vld [vmem:[%s3 + $0xa8] sm:$0xff]
    %v566 = vld [vmem:[%s3 + $0xb0] sm:$0xff]
    %v567 = vld [vmem:[%s3 + $0xb8] sm:$0xff]
    %v568 = vld [vmem:[%s3 + $0xc0] sm:$0xff]
    %v569 = vld [vmem:[%s3 + $0xc8] sm:$0xff]
    %v570 = vld [vmem:[%s3 + $0xd0] sm:$0xff]
    %v571 = vld [vmem:[%s3 + $0xd8] sm:$0xff]
    %v572 = vld [vmem:[%s3 + $0xe0] sm:$0xff]
    %v573 = vld [vmem:[%s3 + $0xe8] sm:$0xff]
    %v574 = vld [vmem:[%s3 + $0xf0] sm:$0xff]
    %v575 = vld [vmem:[%s3 + $0xf8] sm:$0xff]
    %v576 = vld [vmem:[%s3 + $0x100] sm:$0xff]
    %v577 = vld [vmem:[%s3 + $0x108] sm:$0xff]
    %v578 = vld [vmem:[%s3 + $0x110] sm:$0xff]
    %v579 = vld [vmem:[%s3 + $0x118] sm:$0xff]
    %v580 = vld [vmem:[%s3 + $0x120] sm:$0xff]
    %v581 = vld [vmem:[%s3 + $0x128] sm:$0xff]
    %v582 = vld [vmem:[%s3 + $0x130] sm:$0xff]
    %v583 = vld [vmem:[%s3 + $0x138] sm:$0xff]
    %v584 = vld [vmem:[%s3 + $0x140] sm:$0xff]
    %v585 = vld [vmem:[%s3 + $0x148] sm:$0xff]
    %v586 = vld [vmem:[%s3 + $0x150] sm:$0xff]
    %v587 = vld [vmem:[%s3 + $0x158] sm:$0xff]
    %v588 = vld [vmem:[%s3 + $0x160] sm:$0xff]
    %v589 = vld [vmem:[%s3 + $0x168] sm:$0xff]
    %v590 = vld [vmem:[%s3 + $0x170] sm:$0xff]
    %v591 = vld [vmem:[%s3 + $0x178] sm:$0xff]
    %v592 = vld [vmem:[%s3 + $0x180] sm:$0xff]
    %v593 = vld [vmem:[%s3 + $0x188] sm:$0xff]
    %v594 = vld [vmem:[%s3 + $0x190] sm:$0xff]
    %v595 = vld [vmem:[%s3 + $0x198] sm:$0xff]
    %v596 = vld [vmem:[%s3 + $0x1a0] sm:$0xff]
    %v597 = vld [vmem:[%s3 + $0x1a8] sm:$0xff]
    %v598 = vld [vmem:[%s3 + $0x1b0] sm:$0xff]
    %v599 = vld [vmem:[%s3 + $0x1b8] sm:$0xff]
    %v600 = vld [vmem:[%s3 + $0x1c0] sm:$0xff]
    %v601 = vld [vmem:[%s3 + $0x1c8] sm:$0xff]
    %v602 = vld [vmem:[%s3 + $0x1d0] sm:$0xff]
    %v603 = vld [vmem:[%s3 + $0x1d8] sm:$0xff]
    %v604 = vld [vmem:[%s3 + $0x1e0] sm:$0xff]
    %v605 = vld [vmem:[%s3 + $0x1e8] sm:$0xff]
    %v606 = vld [vmem:[%s3 + $0x1f0] sm:$0xff]
    %v607 = vld [vmem:[%s3 + $0x1f8] sm:$0xff]
    %v608 = vld [vmem:[%s3 + $0x200] sm:$0xff]
    %v609 = vld [vmem:[%s3 + $0x208] sm:$0xff]
    %v610 = vld [vmem:[%s3 + $0x210] sm:$0xff]
    %v611 = vld [vmem:[%s3 + $0x218] sm:$0xff]
    %v612 = vld [vmem:[%s3 + $0x220] sm:$0xff]
    %v613 = vld [vmem:[%s3 + $0x228] sm:$0xff]
    %v614 = vld [vmem:[%s3 + $0x230] sm:$0xff]
    %v615 = vld [vmem:[%s3 + $0x238] sm:$0xff]
    %v616 = vld [vmem:[%s3 + $0x240] sm:$0xff]
    %v617 = vld [vmem:[%s3 + $0x248] sm:$0xff]
    %v618 = vld [vmem:[%s3 + $0x250] sm:$0xff]
    %v619 = vld [vmem:[%s3 + $0x258] sm:$0xff]
    %v620 = vld [vmem:[%s3 + $0x260] sm:$0xff]
    %v621 = vld [vmem:[%s3 + $0x268] sm:$0xff]
    %v622 = vld [vmem:[%s3 + $0x270] sm:$0xff]
    %v623 = vld [vmem:[%s3 + $0x278] sm:$0xff]
    %v624 = vld [vmem:[%s3 + $0x280] sm:$0xff]
    %v625 = vld [vmem:[%s3 + $0x288] sm:$0xff]
    %v626 = vld [vmem:[%s3 + $0x290] sm:$0xff]
    %v627 = vld [vmem:[%s3 + $0x298] sm:$0xff]
    %v628 = vld [vmem:[%s3 + $0x2a0] sm:$0xff]
    %v629 = vld [vmem:[%s3 + $0x2a8] sm:$0xff]
    %v630 = vld [vmem:[%s3 + $0x2b0] sm:$0xff]
    %v631 = vld [vmem:[%s3 + $0x2b8] sm:$0xff]
    %v632 = vld [vmem:[%s3 + $0x2c0] sm:$0xff]
    %v633 = vld [vmem:[%s3 + $0x2c8] sm:$0xff]
    %v634 = vld [vmem:[%s3 + $0x2d0] sm:$0xff]
    %v635 = vld [vmem:[%s3 + $0x2d8] sm:$0xff]
    %v636 = vld [vmem:[%s3 + $0x2e0] sm:$0xff]
    %v637 = vld [vmem:[%s3 + $0x2e8] sm:$0xff]
    %v638 = vld [vmem:[%s3 + $0x2f0] sm:$0xff]
    %v639 = vld [vmem:[%s3 + $0x2f8] sm:$0xff]
    %v640 = vld [vmem:[%s3 + $0x300] sm:$0xff]
    %v641 = vld [vmem:[%s3 + $0x308] sm:$0xff]
    %v642 = vld [vmem:[%s3 + $0x310] sm:$0xff]
    %v643 = vld [vmem:[%s3 + $0x318] sm:$0xff]
    %v644 = vld [vmem:[%s3 + $0x320] sm:$0xff]
    %v645 = vld [vmem:[%s3 + $0x328] sm:$0xff]
    %v646 = vld [vmem:[%s3 + $0x330] sm:$0xff]
    %v647 = vld [vmem:[%s3 + $0x338] sm:$0xff]
    %v648 = vld [vmem:[%s3 + $0x340] sm:$0xff]
    %v649 = vld [vmem:[%s3 + $0x348] sm:$0xff]
    %v650 = vld [vmem:[%s3 + $0x350] sm:$0xff]
    %v651 = vld [vmem:[%s3 + $0x358] sm:$0xff]
    %v652 = vld [vmem:[%s3 + $0x360] sm:$0xff]
    %v653 = vld [vmem:[%s3 + $0x368] sm:$0xff]
    %v654 = vld [vmem:[%s3 + $0x370] sm:$0xff]
    %v655 = vld [vmem:[%s3 + $0x378] sm:$0xff]
    %v656 = vld [vmem:[%s3 + $0x380] sm:$0xff]
    %v657 = vld [vmem:[%s3 + $0x388] sm:$0xff]
    %v658 = vld [vmem:[%s3 + $0x390] sm:$0xff]
    %v659 = vld [vmem:[%s3 + $0x398] sm:$0xff]
    %v660 = vld [vmem:[%s3 + $0x3a0] sm:$0xff]
    %v661 = vld [vmem:[%s3 + $0x3a8] sm:$0xff]
    %v662 = vld [vmem:[%s3 + $0x3b0] sm:$0xff]
    %v663 = vld [vmem:[%s3 + $0x3b8] sm:$0xff]
    %v664 = vld [vmem:[%s4] sm:$0x7]
    %v666 = vlaneseq
    %v667 = vshrl.u32 %v666, 7
    %v668 = vsub.s32 0, %v667
    %v669 = vrot.slane %v664, %v668
    %v670 = vlaneseq
    %v671 = vshrl.u32 %v670, 7
    %v672 = vsub.s32 1, %v671
    %v673 = vrot.slane %v664, %v672
    %v674 = vlaneseq
    %v675 = vshrl.u32 %v674, 7
    %v676 = vsub.s32 2, %v675
    %v677 = vrot.slane %v664, %v676
    %vm681 = vcmask 523264
    %v683 = vsel %vm681, %v543, 0
    %685 = vmatprep.subr.mxu0 %v590
    %686 = vmatpush1.msra.mxu0 %v589
    %687 = vmatprep.subr.mxu0 %v587
    %688 = vmatpush1.msra.mxu0 %v586
    %689 = vmatprep.subr.mxu0 %v584
    %690 = vmatpush1.msra.mxu0 %v583
    %691 = vmatprep.subr.mxu0 %v581
    %692 = vmatpush1.msra.mxu0 %v580
    %693 = vmatprep.subr.mxu0 %v578
    %694 = vmatpush1.msra.mxu0 %v577
    %695 = vmatprep.subr.mxu0 %v575
    %696 = vmatpush1.msra.mxu0 %v574
    %697 = vmatprep.subr.mxu0 %v572
    %698 = vmatpush1.msra.mxu0 %v571
    %699 = vmatprep.subr.mxu0 %v569
    %700 = vmatpush1.msra.mxu0 %v568
    %701 = vmatprep.subr.mxu0 %v566
    %702 = vmatpush1.msra.mxu0 %v565
    %703 = vmatprep.subr.mxu0 %v563
    %704 = vmatpush1.msra.mxu0 %v562
    %705 = vmatprep.subr.mxu0 %v560
    %706 = vmatpush1.msra.mxu0 %v559
    %707 = vmatprep.subr.mxu0 %v557
    %708 = vmatpush1.msra.mxu0 %v556
    %709 = vmatprep.subr.mxu0 %v554
    %710 = vmatpush1.msra.mxu0 %v553
    %711 = vmatprep.subr.mxu0 %v551
    %712 = vmatpush1.msra.mxu0 %v550
    %713 = vmatprep.subr.mxu0 %v548
    %714 = vmatpush1.msra.mxu0 %v547
    %715 = vmatprep.subr.mxu0 %v545
    %716 = vmatpush1.msra.mxu0 %v544
    %717 = vmatprep.subr.mxu0 %v638
    %718 = vmatpush2.msra.mxu0 %v637
    %719 = vmatprep.subr.mxu0 %v635
    %720 = vmatpush2.msra.mxu0 %v634
    %721 = vmatprep.subr.mxu0 %v632
    %722 = vmatpush2.msra.mxu0 %v631
    %723 = vmatprep.subr.mxu0 %v629
    %724 = vmatpush2.msra.mxu0 %v628
    %725 = vmatprep.subr.mxu0 %v626
    %726 = vmatpush2.msra.mxu0 %v625
    %727 = vmatprep.subr.mxu0 %v623
    %728 = vmatpush2.msra.mxu0 %v622
    %729 = vmatprep.subr.mxu0 %v620
    %730 = vmatpush2.msra.mxu0 %v619
    %731 = vmatprep.subr.mxu0 %v617
    %732 = vmatpush2.msra.mxu0 %v616
    %733 = vmatprep.subr.mxu0 %v614
    %734 = vmatpush2.msra.mxu0 %v613
    %735 = vmatprep.subr.mxu0 %v611
    %736 = vmatpush2.msra.mxu0 %v610
    %737 = vmatprep.subr.mxu0 %v608
    %738 = vmatpush2.msra.mxu0 %v607
    %739 = vmatprep.subr.mxu0 %v605
    %740 = vmatpush2.msra.mxu0 %v604
    %741 = vmatprep.subr.mxu0 %v602
    %742 = vmatpush2.msra.mxu0 %v601
    %743 = vmatprep.subr.mxu0 %v599
    %744 = vmatpush2.msra.mxu0 %v598
    %745 = vmatprep.subr.mxu0 %v596
    %746 = vmatpush2.msra.mxu0 %v595
    %747 = vmatprep.subr.mxu0 %v593
    %748 = vmatpush2.msra.mxu0 %v592
    %749 = vmatprep.mubr.f32.mxu0 %v542
    %750 = vmatmul.mubr.f32.gmra.mxu0 %v541
    %v751 = vpop.f32.mrf.mxu0
    %v752 = vadd.f32 %v669, %v751
    %v753 = vpop.f32.mrf.mxu0
    %v754 = vadd.f32 %v673, %v753
    %755 = vdwg.mxu0
    %756 = vmatprep.subr.mxu0 0.0
    %757 = vmatpush1.msra.mxu0 0.0
    %758 = vmatprep.subr.mxu0 0.0
    %759 = vmatpush1.msra.mxu0 0.0
    %760 = vmatprep.subr.mxu0 0.0
    %761 = vmatpush1.msra.mxu0 0.0
    %762 = vmatprep.subr.mxu0 0.0
    %763 = vmatpush1.msra.mxu0 0.0
    %764 = vmatprep.subr.mxu0 0.0
    %765 = vmatpush1.msra.mxu0 0.0
    %766 = vmatprep.subr.mxu0 0.0
    %767 = vmatpush1.msra.mxu0 0.0
    %768 = vmatprep.subr.mxu0 0.0
    %769 = vmatpush1.msra.mxu0 0.0
    %770 = vmatprep.subr.mxu0 0.0
    %771 = vmatpush1.msra.mxu0 0.0
    %772 = vmatprep.subr.mxu0 %v662
    %773 = vmatpush1.msra.mxu0 %v661
    %774 = vmatprep.subr.mxu0 %v659
    %775 = vmatpush1.msra.mxu0 %v658
    %776 = vmatprep.subr.mxu0 %v656
    %777 = vmatpush1.msra.mxu0 %v655
    %778 = vmatprep.subr.mxu0 %v653
    %779 = vmatpush1.msra.mxu0 %v652
    %780 = vmatprep.subr.mxu0 %v650
    %781 = vmatpush1.msra.mxu0 %v649
    %782 = vmatprep.subr.mxu0 %v647
    %783 = vmatpush1.msra.mxu0 %v646
    %784 = vmatprep.subr.mxu0 %v644
    %785 = vmatpush1.msra.mxu0 %v643
    %786 = vmatprep.subr.mxu0 %v641
    %787 = vmatpush1.msra.mxu0 %v640
    %788 = vmatprep.subr.mxu0 0.0
    %789 = vmatpush2.msra.mxu0 0.0
    %790 = vmatprep.subr.mxu0 0.0
    %791 = vmatpush2.msra.mxu0 0.0
    %792 = vmatprep.subr.mxu0 0.0
    %793 = vmatpush2.msra.mxu0 0.0
    %794 = vmatprep.subr.mxu0 0.0
    %795 = vmatpush2.msra.mxu0 0.0
    %796 = vmatprep.subr.mxu0 0.0
    %797 = vmatpush2.msra.mxu0 0.0
    %798 = vmatprep.subr.mxu0 0.0
    %799 = vmatpush2.msra.mxu0 0.0
    %800 = vmatprep.subr.mxu0 0.0
    %801 = vmatpush2.msra.mxu0 0.0
    %802 = vmatprep.subr.mxu0 0.0
    %803 = vmatpush2.msra.mxu0 0.0
    %804 = vmatprep.subr.mxu0 0.0
    %805 = vmatpush2.msra.mxu0 0.0
    %806 = vmatprep.subr.mxu0 0.0
    %807 = vmatpush2.msra.mxu0 0.0
    %808 = vmatprep.subr.mxu0 0.0
    %809 = vmatpush2.msra.mxu0 0.0
    %810 = vmatprep.subr.mxu0 0.0
    %811 = vmatpush2.msra.mxu0 0.0
    %812 = vmatprep.subr.mxu0 0.0
    %813 = vmatpush2.msra.mxu0 0.0
    %814 = vmatprep.subr.mxu0 0.0
    %815 = vmatpush2.msra.mxu0 0.0
    %816 = vmatprep.subr.mxu0 0.0
    %817 = vmatpush2.msra.mxu0 0.0
    %818 = vmatprep.subr.mxu0 0.0
    %819 = vmatpush2.msra.mxu0 0.0
    %820 = vmatprep.mubr.f32.mxu0 0.0
    %821 = vmatmul.mubr.f32.gmra.mxu0 %v683
    %v822 = vpop.f32.mrf.mxu0
    %v823 = vadd.f32 %v752, %v822
    %v824 = vpop.f32.mrf.mxu0
    %v825 = vadd.f32 %v754, %v824
    %826 = vdwg.mxu0
    %827 = vmatprep.subr.mxu0 0.0
    %828 = vmatpush1.msra.mxu0 %v591
    %829 = vmatprep.subr.mxu0 0.0
    %830 = vmatpush1.msra.mxu0 %v588
    %831 = vmatprep.subr.mxu0 0.0
    %832 = vmatpush1.msra.mxu0 %v585
    %833 = vmatprep.subr.mxu0 0.0
    %834 = vmatpush1.msra.mxu0 %v582
    %835 = vmatprep.subr.mxu0 0.0
    %836 = vmatpush1.msra.mxu0 %v579
    %837 = vmatprep.subr.mxu0 0.0
    %838 = vmatpush1.msra.mxu0 %v576
    %839 = vmatprep.subr.mxu0 0.0
    %840 = vmatpush1.msra.mxu0 %v573
    %841 = vmatprep.subr.mxu0 0.0
    %842 = vmatpush1.msra.mxu0 %v570
    %843 = vmatprep.subr.mxu0 0.0
    %844 = vmatpush1.msra.mxu0 %v567
    %845 = vmatprep.subr.mxu0 0.0
    %846 = vmatpush1.msra.mxu0 %v564
    %847 = vmatprep.subr.mxu0 0.0
    %848 = vmatpush1.msra.mxu0 %v561
    %849 = vmatprep.subr.mxu0 0.0
    %850 = vmatpush1.msra.mxu0 %v558
    %851 = vmatprep.subr.mxu0 0.0
    %852 = vmatpush1.msra.mxu0 %v555
    %853 = vmatprep.subr.mxu0 0.0
    %854 = vmatpush1.msra.mxu0 %v552
    %855 = vmatprep.subr.mxu0 0.0
    %856 = vmatpush1.msra.mxu0 %v549
    %857 = vmatprep.subr.mxu0 0.0
    %858 = vmatpush1.msra.mxu0 %v546
    %859 = vmatprep.subr.mxu0 0.0
    %860 = vmatpush2.msra.mxu0 %v639
    %861 = vmatprep.subr.mxu0 0.0
    %862 = vmatpush2.msra.mxu0 %v636
    %863 = vmatprep.subr.mxu0 0.0
    %864 = vmatpush2.msra.mxu0 %v633
    %865 = vmatprep.subr.mxu0 0.0
    %866 = vmatpush2.msra.mxu0 %v630
    %867 = vmatprep.subr.mxu0 0.0
    %868 = vmatpush2.msra.mxu0 %v627
    %869 = vmatprep.subr.mxu0 0.0
    %870 = vmatpush2.msra.mxu0 %v624
    %871 = vmatprep.subr.mxu0 0.0
    %872 = vmatpush2.msra.mxu0 %v621
    %873 = vmatprep.subr.mxu0 0.0
    %874 = vmatpush2.msra.mxu0 %v618
    %875 = vmatprep.subr.mxu0 0.0
    %876 = vmatpush2.msra.mxu0 %v615
    %877 = vmatprep.subr.mxu0 0.0
    %878 = vmatpush2.msra.mxu0 %v612
    %879 = vmatprep.subr.mxu0 0.0
    %880 = vmatpush2.msra.mxu0 %v609
    %881 = vmatprep.subr.mxu0 0.0
    %882 = vmatpush2.msra.mxu0 %v606
    %883 = vmatprep.subr.mxu0 0.0
    %884 = vmatpush2.msra.mxu0 %v603
    %885 = vmatprep.subr.mxu0 0.0
    %886 = vmatpush2.msra.mxu0 %v600
    %887 = vmatprep.subr.mxu0 0.0
    %888 = vmatpush2.msra.mxu0 %v597
    %889 = vmatprep.subr.mxu0 0.0
    %890 = vmatpush2.msra.mxu0 %v594
    %891 = vmatprep.mubr.f32.mxu0 %v542
    %892 = vmatmul.mubr.f32.gmra.mxu0 %v541
    %v893 = vpop.f32.mrf.mxu0
    %v894 = vadd.f32 %v677, %v893
    %v895 = vpop.f32.mrf.mxu0
    %896 = vdwg.mxu0
    %897 = vmatprep.subr.mxu0 0.0
    %898 = vmatpush1.msra.mxu0 0.0
    %899 = vmatprep.subr.mxu0 0.0
    %900 = vmatpush1.msra.mxu0 0.0
    %901 = vmatprep.subr.mxu0 0.0
    %902 = vmatpush1.msra.mxu0 0.0
    %903 = vmatprep.subr.mxu0 0.0
    %904 = vmatpush1.msra.mxu0 0.0
    %905 = vmatprep.subr.mxu0 0.0
    %906 = vmatpush1.msra.mxu0 0.0
    %907 = vmatprep.subr.mxu0 0.0
    %908 = vmatpush1.msra.mxu0 0.0
    %909 = vmatprep.subr.mxu0 0.0
    %910 = vmatpush1.msra.mxu0 0.0
    %911 = vmatprep.subr.mxu0 0.0
    %912 = vmatpush1.msra.mxu0 0.0
    %913 = vmatprep.subr.mxu0 0.0
    %914 = vmatpush1.msra.mxu0 %v663
    %915 = vmatprep.subr.mxu0 0.0
    %916 = vmatpush1.msra.mxu0 %v660
    %917 = vmatprep.subr.mxu0 0.0
    %918 = vmatpush1.msra.mxu0 %v657
    %919 = vmatprep.subr.mxu0 0.0
    %920 = vmatpush1.msra.mxu0 %v654
    %921 = vmatprep.subr.mxu0 0.0
    %922 = vmatpush1.msra.mxu0 %v651
    %923 = vmatprep.subr.mxu0 0.0
    %924 = vmatpush1.msra.mxu0 %v648
    %925 = vmatprep.subr.mxu0 0.0
    %926 = vmatpush1.msra.mxu0 %v645
    %927 = vmatprep.subr.mxu0 0.0
    %928 = vmatpush1.msra.mxu0 %v642
    %929 = vmatprep.subr.mxu0 0.0
    %930 = vmatpush2.msra.mxu0 0.0
    %931 = vmatprep.subr.mxu0 0.0
    %932 = vmatpush2.msra.mxu0 0.0
    %933 = vmatprep.subr.mxu0 0.0
    %934 = vmatpush2.msra.mxu0 0.0
    %935 = vmatprep.subr.mxu0 0.0
    %936 = vmatpush2.msra.mxu0 0.0
    %937 = vmatprep.subr.mxu0 0.0
    %938 = vmatpush2.msra.mxu0 0.0
    %939 = vmatprep.subr.mxu0 0.0
    %940 = vmatpush2.msra.mxu0 0.0
    %941 = vmatprep.subr.mxu0 0.0
    %942 = vmatpush2.msra.mxu0 0.0
    %943 = vmatprep.subr.mxu0 0.0
    %944 = vmatpush2.msra.mxu0 0.0
    %945 = vmatprep.subr.mxu0 0.0
    %946 = vmatpush2.msra.mxu0 0.0
    %947 = vmatprep.subr.mxu0 0.0
    %948 = vmatpush2.msra.mxu0 0.0
    %949 = vmatprep.subr.mxu0 0.0
    %950 = vmatpush2.msra.mxu0 0.0
    %951 = vmatprep.subr.mxu0 0.0
    %952 = vmatpush2.msra.mxu0 0.0
    %953 = vmatprep.subr.mxu0 0.0
    %954 = vmatpush2.msra.mxu0 0.0
    %955 = vmatprep.subr.mxu0 0.0
    %956 = vmatpush2.msra.mxu0 0.0
    %957 = vmatprep.subr.mxu0 0.0
    %958 = vmatpush2.msra.mxu0 0.0
    %959 = vmatprep.subr.mxu0 0.0
    %960 = vmatpush2.msra.mxu0 0.0
    %961 = vmatprep.mubr.f32.mxu0 0.0
    %962 = vmatmul.mubr.f32.gmra.mxu0 %v683
    %v963 = vpop.f32.mrf.mxu0
    %v964 = vadd.f32 %v894, %v963
    %v965 = vpop.f32.mrf.mxu0
    %966 = vdwg.mxu0
    %v967 = vmax.f32 %v823, 0.0
    %v968 = vmax.f32 %v825, 0.0
    %v969 = vmax.f32 %v964, 0.0
    %v970 = vld [vmem:[%s5] sm:$0xff]
    %v971 = vld [vmem:[%s5 + $0x8] sm:$0xff]
    %v972 = vld [vmem:[%s5 + $0x10] sm:$0xff]
    %v973 = vld [vmem:[%s5 + $0x18] sm:$0xff]
    %v974 = vld [vmem:[%s5 + $0x20] sm:$0xff]
    %v975 = vld [vmem:[%s5 + $0x28] sm:$0xff]
    %v976 = vld [vmem:[%s5 + $0x30] sm:$0xff]
    %v977 = vld [vmem:[%s5 + $0x38] sm:$0xff]
    %v978 = vld [vmem:[%s5 + $0x40] sm:$0xff]
    %v979 = vld [vmem:[%s5 + $0x48] sm:$0xff]
    %v980 = vld [vmem:[%s5 + $0x50] sm:$0xff]
    %v981 = vld [vmem:[%s5 + $0x58] sm:$0xff]
    %v982 = vld [vmem:[%s5 + $0x60] sm:$0xff]
    %v983 = vld [vmem:[%s5 + $0x68] sm:$0xff]
    %v984 = vld [vmem:[%s5 + $0x70] sm:$0xff]
    %v985 = vld [vmem:[%s5 + $0x78] sm:$0xff]
    %v986 = vld [vmem:[%s5 + $0x80] sm:$0xff]
    %v987 = vld [vmem:[%s5 + $0x88] sm:$0xff]
    %v988 = vld [vmem:[%s5 + $0x90] sm:$0xff]
    %v989 = vld [vmem:[%s5 + $0x98] sm:$0xff]
    %v990 = vld [vmem:[%s5 + $0xa0] sm:$0xff]
    %v991 = vld [vmem:[%s5 + $0xa8] sm:$0xff]
    %v992 = vld [vmem:[%s5 + $0xb0] sm:$0xff]
    %v993 = vld [vmem:[%s5 + $0xb8] sm:$0xff]
    %v994 = vld [vmem:[%s5 + $0xc0] sm:$0xff]
    %v995 = vld [vmem:[%s5 + $0xc8] sm:$0xff]
    %v996 = vld [vmem:[%s5 + $0xd0] sm:$0xff]
    %v997 = vld [vmem:[%s5 + $0xd8] sm:$0xff]
    %v998 = vld [vmem:[%s5 + $0xe0] sm:$0xff]
    %v999 = vld [vmem:[%s5 + $0xe8] sm:$0xff]
    %v1000 = vld [vmem:[%s5 + $0xf0] sm:$0xff]
    %v1001 = vld [vmem:[%s5 + $0xf8] sm:$0xff]
    %v1002 = vld [vmem:[%s5 + $0x100] sm:$0xff]
    %v1003 = vld [vmem:[%s5 + $0x108] sm:$0xff]
    %v1004 = vld [vmem:[%s5 + $0x110] sm:$0xff]
    %v1005 = vld [vmem:[%s5 + $0x118] sm:$0xff]
    %v1006 = vld [vmem:[%s5 + $0x120] sm:$0xff]
    %v1007 = vld [vmem:[%s5 + $0x128] sm:$0xff]
    %v1008 = vld [vmem:[%s5 + $0x130] sm:$0xff]
    %v1009 = vld [vmem:[%s5 + $0x138] sm:$0xff]
    %v1010 = vld [vmem:[%s6] sm:$0x1]
    %v1012 = vlaneseq
    %v1013 = vshrl.u32 %v1012, 7
    %v1014 = vsub.s32 0, %v1013
    %v1015 = vrot.slane %v1010, %v1014
    %v1018 = vsel %vm681, %v969, 0
    %1020 = vmatprep.subr.mxu0 0.0
    %1021 = vmatpush1.msra.mxu0 %v985
    %1022 = vmatprep.subr.mxu0 0.0
    %1023 = vmatpush1.msra.mxu0 %v984
    %1024 = vmatprep.subr.mxu0 0.0
    %1025 = vmatpush1.msra.mxu0 %v983
    %1026 = vmatprep.subr.mxu0 0.0
    %1027 = vmatpush1.msra.mxu0 %v982
    %1028 = vmatprep.subr.mxu0 0.0
    %1029 = vmatpush1.msra.mxu0 %v981
    %1030 = vmatprep.subr.mxu0 0.0
    %1031 = vmatpush1.msra.mxu0 %v980
    %1032 = vmatprep.subr.mxu0 0.0
    %1033 = vmatpush1.msra.mxu0 %v979
    %1034 = vmatprep.subr.mxu0 0.0
    %1035 = vmatpush1.msra.mxu0 %v978
    %1036 = vmatprep.subr.mxu0 0.0
    %1037 = vmatpush1.msra.mxu0 %v977
    %1038 = vmatprep.subr.mxu0 0.0
    %1039 = vmatpush1.msra.mxu0 %v976
    %1040 = vmatprep.subr.mxu0 0.0
    %1041 = vmatpush1.msra.mxu0 %v975
    %1042 = vmatprep.subr.mxu0 0.0
    %1043 = vmatpush1.msra.mxu0 %v974
    %1044 = vmatprep.subr.mxu0 0.0
    %1045 = vmatpush1.msra.mxu0 %v973
    %1046 = vmatprep.subr.mxu0 0.0
    %1047 = vmatpush1.msra.mxu0 %v972
    %1048 = vmatprep.subr.mxu0 0.0
    %1049 = vmatpush1.msra.mxu0 %v971
    %1050 = vmatprep.subr.mxu0 0.0
    %1051 = vmatpush1.msra.mxu0 %v970
    %1052 = vmatprep.subr.mxu0 0.0
    %1053 = vmatpush2.msra.mxu0 %v1001
    %1054 = vmatprep.subr.mxu0 0.0
    %1055 = vmatpush2.msra.mxu0 %v1000
    %1056 = vmatprep.subr.mxu0 0.0
    %1057 = vmatpush2.msra.mxu0 %v999
    %1058 = vmatprep.subr.mxu0 0.0
    %1059 = vmatpush2.msra.mxu0 %v998
    %1060 = vmatprep.subr.mxu0 0.0
    %1061 = vmatpush2.msra.mxu0 %v997
    %1062 = vmatprep.subr.mxu0 0.0
    %1063 = vmatpush2.msra.mxu0 %v996
    %1064 = vmatprep.subr.mxu0 0.0
    %1065 = vmatpush2.msra.mxu0 %v995
    %1066 = vmatprep.subr.mxu0 0.0
    %1067 = vmatpush2.msra.mxu0 %v994
    %1068 = vmatprep.subr.mxu0 0.0
    %1069 = vmatpush2.msra.mxu0 %v993
    %1070 = vmatprep.subr.mxu0 0.0
    %1071 = vmatpush2.msra.mxu0 %v992
    %1072 = vmatprep.subr.mxu0 0.0
    %1073 = vmatpush2.msra.mxu0 %v991
    %1074 = vmatprep.subr.mxu0 0.0
    %1075 = vmatpush2.msra.mxu0 %v990
    %1076 = vmatprep.subr.mxu0 0.0
    %1077 = vmatpush2.msra.mxu0 %v989
    %1078 = vmatprep.subr.mxu0 0.0
    %1079 = vmatpush2.msra.mxu0 %v988
    %1080 = vmatprep.subr.mxu0 0.0
    %1081 = vmatpush2.msra.mxu0 %v987
    %1082 = vmatprep.subr.mxu0 0.0
    %1083 = vmatpush2.msra.mxu0 %v986
    %1084 = vmatprep.mubr.f32.mxu0 %v968
    %1085 = vmatmul.mubr.f32.gmra.mxu0 %v967
    %v1086 = vpop.f32.mrf.mxu0
    %v1087 = vadd.f32 %v1015, %v1086
    %v1088 = vpop.f32.mrf.mxu0
    %1089 = vdwg.mxu0
    %1090 = vmatprep.subr.mxu0 0.0
    %1091 = vmatpush1.msra.mxu0 0.0
    %1092 = vmatprep.subr.mxu0 0.0
    %1093 = vmatpush1.msra.mxu0 0.0
    %1094 = vmatprep.subr.mxu0 0.0
    %1095 = vmatpush1.msra.mxu0 0.0
    %1096 = vmatprep.subr.mxu0 0.0
    %1097 = vmatpush1.msra.mxu0 0.0
    %1098 = vmatprep.subr.mxu0 0.0
    %1099 = vmatpush1.msra.mxu0 0.0
    %1100 = vmatprep.subr.mxu0 0.0
    %1101 = vmatpush1.msra.mxu0 0.0
    %1102 = vmatprep.subr.mxu0 0.0
    %1103 = vmatpush1.msra.mxu0 0.0
    %1104 = vmatprep.subr.mxu0 0.0
    %1105 = vmatpush1.msra.mxu0 0.0
    %1106 = vmatprep.subr.mxu0 0.0
    %1107 = vmatpush1.msra.mxu0 %v1009
    %1108 = vmatprep.subr.mxu0 0.0
    %1109 = vmatpush1.msra.mxu0 %v1008
    %1110 = vmatprep.subr.mxu0 0.0
    %1111 = vmatpush1.msra.mxu0 %v1007
    %1112 = vmatprep.subr.mxu0 0.0
    %1113 = vmatpush1.msra.mxu0 %v1006
    %1114 = vmatprep.subr.mxu0 0.0
    %1115 = vmatpush1.msra.mxu0 %v1005
    %1116 = vmatprep.subr.mxu0 0.0
    %1117 = vmatpush1.msra.mxu0 %v1004
    %1118 = vmatprep.subr.mxu0 0.0
    %1119 = vmatpush1.msra.mxu0 %v1003
    %1120 = vmatprep.subr.mxu0 0.0
    %1121 = vmatpush1.msra.mxu0 %v1002
    %1122 = vmatprep.subr.mxu0 0.0
    %1123 = vmatpush2.msra.mxu0 0.0
    %1124 = vmatprep.subr.mxu0 0.0
    %1125 = vmatpush2.msra.mxu0 0.0
    %1126 = vmatprep.subr.mxu0 0.0
    %1127 = vmatpush2.msra.mxu0 0.0
    %1128 = vmatprep.subr.mxu0 0.0
    %1129 = vmatpush2.msra.mxu0 0.0
    %1130 = vmatprep.subr.mxu0 0.0
    %1131 = vmatpush2.msra.mxu0 0.0
    %1132 = vmatprep.subr.mxu0 0.0
    %1133 = vmatpush2.msra.mxu0 0.0
    %1134 = vmatprep.subr.mxu0 0.0
    %1135 = vmatpush2.msra.mxu0 0.0
    %1136 = vmatprep.subr.mxu0 0.0
    %1137 = vmatpush2.msra.mxu0 0.0
    %1138 = vmatprep.subr.mxu0 0.0
    %1139 = vmatpush2.msra.mxu0 0.0
    %1140 = vmatprep.subr.mxu0 0.0
    %1141 = vmatpush2.msra.mxu0 0.0
    %1142 = vmatprep.subr.mxu0 0.0
    %1143 = vmatpush2.msra.mxu0 0.0
    %1144 = vmatprep.subr.mxu0 0.0
    %1145 = vmatpush2.msra.mxu0 0.0
    %1146 = vmatprep.subr.mxu0 0.0
    %1147 = vmatpush2.msra.mxu0 0.0
    %1148 = vmatprep.subr.mxu0 0.0
    %1149 = vmatpush2.msra.mxu0 0.0
    %1150 = vmatprep.subr.mxu0 0.0
    %1151 = vmatpush2.msra.mxu0 0.0
    %1152 = vmatprep.subr.mxu0 0.0
    %1153 = vmatpush2.msra.mxu0 0.0
    %1154 = vmatprep.mubr.f32.mxu0 0.0
    %1155 = vmatmul.mubr.f32.gmra.mxu0 %v1018
    %v1156 = vpop.f32.mrf.mxu0
    %v1157 = vadd.f32 %v1087, %v1156
    %v1158 = vpop.f32.mrf.mxu0
    %1159 = vdwg.mxu0
    %1160 = vst [vmem:[#allocation2] sm:$0x3] %v1157
    // Predicated region
    $region30: #{tpu_custom_call.1} parent=1 // pred_check
      _
    $region31: #{tpu_custom_call.1} parent=1 // pred_check_branch
      %1162 = sbr.rel (0) target = $region33
    $region32: #{tpu_custom_call.1} parent=1 // pred_region
      %s1164 = ssub.s32 32, 32
      %1165 = vsyncadd [#allocation3], %s1164
      %s1167 = sshll.u32 [#allocation2], 4
      %s1168 = int_to_ptr.vmem [resolvable:$true] %s1167
      %1170 = dma.vmem_to_hbm [thread:$0]  %s1168, 32, %s7, [#allocation3]
    $region33: #{tpu_custom_call.1} parent=1 // pred_fallthru
      _
    // Predicated region
    $region34: #{tpu_custom_call.1} parent=1 // pred_check
      _
    $region35: #{tpu_custom_call.1} parent=1 // pred_check_branch
      %1172 = sbr.rel (0) target = $region37
    $region36: #{tpu_custom_call.1} parent=1 // pred_region
      %1173 = dma.done [#allocation3], 32
    $region37: #{tpu_custom_call.1} parent=1 // pred_fallthru
      _
    %1174 = vsyncpa [#allocation3], 1

</llo_original>
